<compile_context>
chip_gen: v7x
topology: tpu7x:2x2x1
jax: 0.10.0
libtpu: 0.0.40
codegen_flags: <defaults>
</compile_context>

<pallas_src>
import numpy as np
import jax
import jax.numpy as jnp
from jax.experimental import pallas as pl
from jax.experimental.pallas import tpu as pltpu

# ---------------- configuration (small, consistent with the module) ----------------
B = 2                # batch of graphs
N = 8                # n_max_nodes
BN = B * N           # total nodes in the flattened batch
B_PAD = 8            # graph-level rows padded to a full sublane group
F_IN = 4             # input_dim (node feature size)
F_PAD = 8            # node features zero-padded to 8 for sublane alignment
H = 32               # hidden_dim_enc == hidden_dim_dec
LAT = 16             # latent_dim
M = N * (N - 1) // 2 # 28 upper-triangle edges
M_PAD = 32           # padded edge count
OUT_PAD = 128        # lane-dense output width (N*N = 64 zero-padded to 128 lanes)
LEAKY = 0.2
BN_EPS = 1e-5

# ---- weight slab row offsets (all sublane-aligned, multiples of 8) ----
R_W10 = 0                   # [F_PAD, H]  GIN conv0 Linear 1
R_W20 = R_W10 + F_PAD       # [H, H]      GIN conv0 Linear 2 (BN folded in)
R_W11 = R_W20 + H           # [H, H]      GIN conv1 Linear 1
R_W21 = R_W11 + H           # [H, H]      GIN conv1 Linear 2 (BN folded in)
R_WED = R_W21 + H           # [H, H]      pooled-BN o fc o fc_mu o decoder Linear0 composed
R_WD1 = R_WED + H           # [H, H]      decoder Linear 1
R_WDF = R_WD1 + H           # [H, H]      decoder last layer as logit difference (cols M..: 0)
R_BIAS = R_WDF + H          # [8, H]      bias rows (7 used)
W_ROWS = R_BIAS + 8         # 208

# ---- data slab row offsets ----
R_SCAT = 0                  # [M_PAD, 128] symmetric upper-triangle scatter matrix
R_X = R_SCAT + M_PAD        # [BN, :F_PAD] flattened node features
R_A = R_X + BN              # [BN, :BN]    block-diagonal adjacency + I
R_POOL = R_A + BN           # [B_PAD, :BN] global_add_pool indicator matrix
R_GD = R_POOL + B_PAD       # [B_PAD, :M_PAD] gumbel noise differences (g0 - g1)
D_ROWS = R_GD + B_PAD       # 80

# ---- module-level constants (baked once; never rebuilt per trace) ----
_iu, _ju = np.triu_indices(N, k=1)
_SCAT = np.zeros((M_PAD, OUT_PAD), np.float32)
_SCAT[np.arange(M), _iu * N + _ju] = 1.0
_SCAT[np.arange(M), _ju * N + _iu] = 1.0

_POOL = np.zeros((B_PAD, BN), np.float32)
for _b in range(B):
    _POOL[_b, _b * N:(_b + 1) * N] = 1.0

_DATA_BASE = np.zeros((D_ROWS, OUT_PAD), np.float32)
_DATA_BASE[R_SCAT:R_SCAT + M_PAD, :] = _SCAT
_DATA_BASE[R_POOL:R_POOL + B_PAD, :BN] = _POOL


# --------------------------------- Pallas kernel -----------------------------------
def vae_kernel(w_ref, d_ref, out_ref):
    f32 = jnp.float32
    leaky = lambda v: jnp.where(v > 0.0, v, LEAKY * v)

    bias = w_ref[R_BIAS:R_BIAS + 8, :]            # [8, H]   one row per folded layer
    A = d_ref[R_A:R_A + BN, 0:BN]                 # [BN, BN] block-diagonal adjacency + I
    h = d_ref[R_X:R_X + BN, 0:F_PAD]              # [BN, F_PAD] flattened node features

    # GIN conv 0 (eps=0): nn((1+eps)*x + sum_j x_j) == nn((A+I)@x); BN folded into Linear 2
    z = jnp.dot(A, h, preferred_element_type=f32)
    z = leaky(jnp.dot(z, w_ref[R_W10:R_W10 + F_PAD, :], preferred_element_type=f32)
              + bias[0:1, :])
    z = leaky(jnp.dot(z, w_ref[R_W20:R_W20 + H, :], preferred_element_type=f32)
              + bias[1:2, :])
    # GIN conv 1 (F.dropout is identity in eval mode)
    z = jnp.dot(A, z, preferred_element_type=f32)
    z = leaky(jnp.dot(z, w_ref[R_W11:R_W11 + H, :], preferred_element_type=f32)
              + bias[2:3, :])
    z = leaky(jnp.dot(z, w_ref[R_W21:R_W21 + H, :], preferred_element_type=f32)
              + bias[3:4, :])

    # global_add_pool as a pooling matmul (rows B..7 of the pool matrix are zero), then the
    # composed (pooled-BN o fc o fc_mu o decoder-Linear0) affine. Eval reparameterize == mu.
    g = jnp.dot(d_ref[R_POOL:R_POOL + B_PAD, 0:BN], z, preferred_element_type=f32)  # [8, H]
    d = jnp.maximum(jnp.dot(g, w_ref[R_WED:R_WED + H, :], preferred_element_type=f32)
                    + bias[4:5, :], 0.0)
    d = jnp.maximum(jnp.dot(d, w_ref[R_WD1:R_WD1 + H, :], preferred_element_type=f32)
                    + bias[5:6, :], 0.0)

    # F.gumbel_softmax(hard=True)[:, :, 0]: 1.0 iff (logit0+g0) >= (logit1+g1); tau > 0
    # preserves the argmax, so only the sign of the logit difference matters.
    diff = (jnp.dot(d, w_ref[R_WDF:R_WDF + H, :], preferred_element_type=f32)
            + bias[6:7, :] + d_ref[R_GD:R_GD + B_PAD, 0:M_PAD])                     # [8, M_PAD]
    col = jax.lax.broadcasted_iota(jnp.int32, (B_PAD, M_PAD), 1)
    sel = jnp.where((diff >= 0.0) & (col < M), 1.0, 0.0).astype(f32)                # mask pad cols

    # Symmetric upper-triangle scatter (adj[i,j] = adj[j,i] = sel[k]) as a 0/1 matmul into a
    # lane-dense [8, 128] output slab (fully unmasked stores).
    out_ref[...] = jnp.dot(sel, d_ref[R_SCAT:R_SCAT + M_PAD, :], preferred_element_type=f32)


# ------------------------------ parameters & packing --------------------------------
def init_params(key):
    """Unfolded, torch-shaped synthetic parameters (shapes match the module's __init__)."""
    def lin(k, fi, fo):
        kw, kb = jax.random.split(k)
        w = jax.random.normal(kw, (fi, fo), jnp.float32) * 0.1
        b = jax.random.normal(kb, (1, fo), jnp.float32) * 0.1
        return w, b

    def bn_affine(dim):
        # fresh torch BatchNorm1d in eval mode: weight=1, bias=0, mean=0, var=1
        scale = jnp.full((1, dim), 1.0 / jnp.sqrt(1.0 + BN_EPS), jnp.float32)
        shift = jnp.zeros((1, dim), jnp.float32)
        return scale, shift

    ks = jax.random.split(key, 9)
    p = {}
    p["w10"], p["b10"] = lin(ks[0], F_IN, H)        # GIN conv0 Linear 1
    p["s0"], p["t0"] = bn_affine(H)                 # GIN conv0 BatchNorm1d
    p["w20"], p["b20"] = lin(ks[1], H, H)           # GIN conv0 Linear 2
    p["w11"], p["b11"] = lin(ks[2], H, H)           # GIN conv1 Linear 1
    p["s1"], p["t1"] = bn_affine(H)                 # GIN conv1 BatchNorm1d
    p["w21"], p["b21"] = lin(ks[3], H, H)           # GIN conv1 Linear 2
    p["ps"], p["pt"] = bn_affine(H)                 # encoder output BatchNorm
    p["wfc"], p["bfc"] = lin(ks[4], H, H)           # GIN.fc (latent_dim == hidden_dim_enc)
    p["wmu"], p["bmu"] = lin(ks[5], H, LAT)         # fc_mu (fc_logvar unused in eval output)
    p["wd0"], p["bd0"] = lin(ks[6], LAT, H)         # decoder Linear 0
    p["wd1"], p["bd1"] = lin(ks[7], H, H)           # decoder Linear 1
    p["wlast"], p["blast"] = lin(ks[8], H, 2 * M)   # decoder last layer -> (B, M, 2)
    return p


def pack_params(p):
    """Fold BN / affine compositions / even-odd split and pack everything into ONE slab."""
    def fold_bn(scale, shift, w, b):
        # (z*scale + shift) @ w + b  ==  z @ (scale.T * w) + (shift @ w + b)
        return w * scale.reshape(-1, 1), shift @ w + b

    def pad(a, rows, cols):
        return jnp.zeros((rows, cols), jnp.float32).at[:a.shape[0], :a.shape[1]].set(a)

    w20f, b20f = fold_bn(p["s0"], p["t0"], p["w20"], p["b20"])
    w21f, b21f = fold_bn(p["s1"], p["t1"], p["w21"], p["b21"])
    # pooled BN -> GIN.fc -> fc_mu -> decoder Linear0: all affine with no nonlinearity
    # between them (eval reparameterize == mu) -> one [H, H] affine.
    wfc_f, bfc_f = fold_bn(p["ps"], p["pt"], p["wfc"], p["bfc"])
    wenc = wfc_f @ p["wmu"]
    benc = bfc_f @ p["wmu"] + p["bmu"]
    wed = wenc @ p["wd0"]                       # [H, H]
    bed = benc @ p["wd0"] + p["bd0"]            # [1, H]
    # decoder last layer: only the sign of (logit0 - logit1) matters for hard gumbel
    wdiff = p["wlast"][:, 0::2] - p["wlast"][:, 1::2]      # [H, M]
    bdiff = p["blast"][:, 0::2] - p["blast"][:, 1::2]      # [1, M]

    bias_rows = jnp.concatenate([
        p["b10"], b20f, p["b11"], b21f, bed, p["bd1"],
        pad(bdiff, 1, H), jnp.zeros((1, H), jnp.float32),
    ], axis=0)                                             # [8, H]

    wslab = jnp.concatenate([
        pad(p["w10"], F_PAD, H),   # R_W10 : input features padded 4 -> 8 (zero rows)
        w20f,                      # R_W20
        p["w11"],                  # R_W11
        w21f,                      # R_W21
        wed,                       # R_WED
        p["wd1"],                  # R_WD1
        pad(wdiff, H, H),          # R_WDF : cols M..M_PAD are zero
        bias_rows,                 # R_BIAS
    ], axis=0)
    assert wslab.shape == (W_ROWS, H)
    return wslab


# ----------------------------------- wrapper ----------------------------------------
@jax.jit
def vae_forward(x, adj, wslab, gumbel_noise):
    # (A_blockdiag + I): GIN residual folded into the adjacency, built per graph
    # (no B^2*N^2 einsum intermediate).
    a_pI = jnp.eye(BN, dtype=jnp.float32)
    for b in range(B):
        a_pI = a_pI.at[b * N:(b + 1) * N, b * N:(b + 1) * N].add(adj[b])

    gd = gumbel_noise[:, :, 0] - gumbel_noise[:, :, 1]

    # One data slab: scatter matrix + pooling matrix baked in the constant base, per-call
    # pieces written in with static-offset updates.
    dslab = jnp.asarray(_DATA_BASE)
    dslab = dslab.at[R_X:R_X + BN, :F_IN].set(x.reshape(BN, F_IN))
    dslab = dslab.at[R_A:R_A + BN, :BN].set(a_pI)
    dslab = dslab.at[R_GD:R_GD + B, :M].set(gd)

    vmem = pl.BlockSpec(memory_space=pltpu.MemorySpace.VMEM)
    out = pl.pallas_call(
        vae_kernel,
        out_shape=jax.ShapeDtypeStruct((B_PAD, OUT_PAD), jnp.float32),
        in_specs=[vmem, vmem],
        out_specs=vmem,
    )(wslab, dslab)

    # glue: drop sublane/lane padding and reshape flat adjacency back to [B, N, N]
    return out[:B, :N * N].reshape(B, N, N)


# --------------------------- pure-JAX reference (unfolded) ---------------------------
def reference_forward(x, adj, p, gumbel):
    leaky = lambda v: jnp.where(v > 0.0, v, LEAKY * v)

    def conv(h, w1, b1, s, t, w2, b2):
        z = jnp.einsum('bij,bjf->bif', adj, h) + h
        z = leaky(jnp.matmul(z, w1) + b1)
        z = z * s + t
        z = leaky(jnp.matmul(z, w2) + b2)
        return z

    h = conv(x, p["w10"], p["b10"], p["s0"], p["t0"], p["w20"], p["b20"])
    h = conv(h, p["w11"], p["b11"], p["s1"], p["t1"], p["w21"], p["b21"])
    g = jnp.sum(h, axis=1)                                   # global_add_pool
    g = g * p["ps"] + p["pt"]
    g = g @ p["wfc"] + p["bfc"]
    mu = g @ p["wmu"] + p["bmu"]                             # eval reparameterize == mu
    d = jax.nn.relu(mu @ p["wd0"] + p["bd0"])
    d = jax.nn.relu(d @ p["wd1"] + p["bd1"])
    logits = (d @ p["wlast"] + p["blast"]).reshape(B, M, 2)
    diff = (logits[..., 0] + gumbel[..., 0]) - (logits[..., 1] + gumbel[..., 1])
    sel = (diff >= 0.0).astype(jnp.float32)
    iu, ju = jnp.triu_indices(N, k=1)
    a_out = jnp.zeros((B, N, N), jnp.float32).at[:, iu, ju].set(sel)
    return diff, a_out + jnp.transpose(a_out, (0, 2, 1))


# ------------------------------------- main ------------------------------------------
if __name__ == "__main__":
    key = jax.random.PRNGKey(0)
    k_x, k_a, k_p, k_g = jax.random.split(key, 4)

    # deterministic inputs: node features + random symmetric adjacency (no self loops)
    x = jax.random.normal(k_x, (B, N, F_IN), jnp.float32)
    a = (jax.random.uniform(k_a, (B, N, N)) > 0.5).astype(jnp.float32)
    a = jnp.triu(a, k=1)
    a = a + jnp.transpose(a, (0, 2, 1))

    params = init_params(k_p)
    wslab = pack_params(params)
    # gumbel noise for F.gumbel_softmax (sampled outside, fed to the kernel)
    gumbel_noise = jax.random.gumbel(k_g, (B, M, 2), jnp.float32)

    adj_out = vae_forward(x, a, wslab, gumbel_noise)
    adj_out = jax.block_until_ready(adj_out)

    # structural checks
    assert adj_out.shape == (B, N, N)
    assert bool(jnp.all((adj_out == 0.0) | (adj_out == 1.0)))            # hard gumbel -> 0/1
    assert bool(jnp.all(adj_out == jnp.transpose(adj_out, (0, 2, 1))))   # symmetric
    assert bool(jnp.all(jnp.diagonal(adj_out, axis1=1, axis2=2) == 0))   # zero diagonal

    # numerical check against the unfolded pure-JAX reference (only on edges whose
    # reference logit margin is comfortably away from the hard-gumbel threshold)
    ref_diff, adj_ref = reference_forward(x, a, params, gumbel_noise)
    iu, ju = jnp.triu_indices(N, k=1)
    ker_edges = adj_out[:, iu, ju]
    ref_edges = (ref_diff >= 0.0).astype(jnp.float32)
    confident = jnp.abs(ref_diff) > 1e-4
    assert bool(jnp.all(jnp.where(confident, ker_edges == ref_edges, True)))

    print("KERNEL_OK")
</pallas_src>

<mosaic_0001>
module attributes {stable_mosaic.version = 11 : i64} {
  func.func @vae_kernel(%arg0: memref<208x32xf32, #tpu.memory_space<vmem>>, %arg1: memref<80x128xf32, #tpu.memory_space<vmem>>, %arg2: memref<8x128xf32, #tpu.memory_space<vmem>>) attributes {dimension_semantics = [], scalar_prefetch = 0 : i64, scratch_operands = 0 : i64, tpu.core_type = #tpu.core_type<tc>} {
    %c200 = arith.constant 200 : index
    %c0 = arith.constant 0 : index
    %0 = vector.load %arg0[%c200, %c0] : memref<208x32xf32, #tpu.memory_space<vmem>>, vector<8x32xf32>
    %c48 = arith.constant 48 : index
    %c0_0 = arith.constant 0 : index
    %1 = vector.load %arg1[%c48, %c0_0] : memref<80x128xf32, #tpu.memory_space<vmem>>, vector<16x16xf32>
    %c32 = arith.constant 32 : index
    %c0_1 = arith.constant 0 : index
    %2 = vector.load %arg1[%c32, %c0_1] : memref<80x128xf32, #tpu.memory_space<vmem>>, vector<16x8xf32>
    %cst = arith.constant dense<0.000000e+00> : vector<16x8xf32>
    %3 = tpu.matmul %1, %2, %cst {dimension_numbers = #tpu.dot_dimension_numbers<[1], [0], [0], [1], [0, 0, 1, 1], [], []>} : vector<16x16xf32>, vector<16x8xf32>, vector<16x8xf32> -> vector<16x8xf32>
    %c0_2 = arith.constant 0 : index
    %c0_3 = arith.constant 0 : index
    %4 = vector.load %arg0[%c0_2, %c0_3] : memref<208x32xf32, #tpu.memory_space<vmem>>, vector<8x32xf32>
    %cst_4 = arith.constant dense<0.000000e+00> : vector<16x32xf32>
    %5 = tpu.matmul %3, %4, %cst_4 {dimension_numbers = #tpu.dot_dimension_numbers<[1], [0], [0], [1], [0, 0, 1, 1], [], []>} : vector<16x8xf32>, vector<8x32xf32>, vector<16x32xf32> -> vector<16x32xf32>
    %6 = vector.extract_strided_slice %0 {offsets = [0, 0], sizes = [1, 32], strides = [1, 1]} : vector<8x32xf32> to vector<1x32xf32>
    %7 = vector.broadcast %6 : vector<1x32xf32> to vector<16x32xf32>
    %8 = arith.addf %5, %7 : vector<16x32xf32>
    %cst_5 = arith.constant 0.000000e+00 : f32
    %9 = vector.broadcast %cst_5 : f32 to vector<16x32xf32>
    %10 = arith.cmpf ogt, %8, %9 : vector<16x32xf32>
    %cst_6 = arith.constant 2.000000e-01 : f32
    %11 = vector.broadcast %cst_6 : f32 to vector<16x32xf32>
    %12 = arith.mulf %11, %8 : vector<16x32xf32>
    %13 = arith.select %10, %8, %12 : vector<16x32xi1>, vector<16x32xf32>
    %c8 = arith.constant 8 : index
    %c0_7 = arith.constant 0 : index
    %14 = vector.load %arg0[%c8, %c0_7] : memref<208x32xf32, #tpu.memory_space<vmem>>, vector<32x32xf32>
    %cst_8 = arith.constant dense<0.000000e+00> : vector<16x32xf32>
    %15 = tpu.matmul %13, %14, %cst_8 {dimension_numbers = #tpu.dot_dimension_numbers<[1], [0], [0], [1], [0, 0, 1, 1], [], []>} : vector<16x32xf32>, vector<32x32xf32>, vector<16x32xf32> -> vector<16x32xf32>
    %16 = vector.extract_strided_slice %0 {offsets = [1, 0], sizes = [1, 32], strides = [1, 1]} : vector<8x32xf32> to vector<1x32xf32>
    %17 = vector.broadcast %16 : vector<1x32xf32> to vector<16x32xf32>
    %18 = arith.addf %15, %17 : vector<16x32xf32>
    %cst_9 = arith.constant 0.000000e+00 : f32
    %19 = vector.broadcast %cst_9 : f32 to vector<16x32xf32>
    %20 = arith.cmpf ogt, %18, %19 : vector<16x32xf32>
    %cst_10 = arith.constant 2.000000e-01 : f32
    %21 = vector.broadcast %cst_10 : f32 to vector<16x32xf32>
    %22 = arith.mulf %21, %18 : vector<16x32xf32>
    %23 = arith.select %20, %18, %22 : vector<16x32xi1>, vector<16x32xf32>
    %cst_11 = arith.constant dense<0.000000e+00> : vector<16x32xf32>
    %24 = tpu.matmul %1, %23, %cst_11 {dimension_numbers = #tpu.dot_dimension_numbers<[1], [0], [0], [1], [0, 0, 1, 1], [], []>} : vector<16x16xf32>, vector<16x32xf32>, vector<16x32xf32> -> vector<16x32xf32>
    %c40 = arith.constant 40 : index
    %c0_12 = arith.constant 0 : index
    %25 = vector.load %arg0[%c40, %c0_12] : memref<208x32xf32, #tpu.memory_space<vmem>>, vector<32x32xf32>
    %cst_13 = arith.constant dense<0.000000e+00> : vector<16x32xf32>
    %26 = tpu.matmul %24, %25, %cst_13 {dimension_numbers = #tpu.dot_dimension_numbers<[1], [0], [0], [1], [0, 0, 1, 1], [], []>} : vector<16x32xf32>, vector<32x32xf32>, vector<16x32xf32> -> vector<16x32xf32>
    %27 = vector.extract_strided_slice %0 {offsets = [2, 0], sizes = [1, 32], strides = [1, 1]} : vector<8x32xf32> to vector<1x32xf32>
    %28 = vector.broadcast %27 : vector<1x32xf32> to vector<16x32xf32>
    %29 = arith.addf %26, %28 : vector<16x32xf32>
    %cst_14 = arith.constant 0.000000e+00 : f32
    %30 = vector.broadcast %cst_14 : f32 to vector<16x32xf32>
    %31 = arith.cmpf ogt, %29, %30 : vector<16x32xf32>
    %cst_15 = arith.constant 2.000000e-01 : f32
    %32 = vector.broadcast %cst_15 : f32 to vector<16x32xf32>
    %33 = arith.mulf %32, %29 : vector<16x32xf32>
    %34 = arith.select %31, %29, %33 : vector<16x32xi1>, vector<16x32xf32>
    %c72 = arith.constant 72 : index
    %c0_16 = arith.constant 0 : index
    %35 = vector.load %arg0[%c72, %c0_16] : memref<208x32xf32, #tpu.memory_space<vmem>>, vector<32x32xf32>
    %cst_17 = arith.constant dense<0.000000e+00> : vector<16x32xf32>
    %36 = tpu.matmul %34, %35, %cst_17 {dimension_numbers = #tpu.dot_dimension_numbers<[1], [0], [0], [1], [0, 0, 1, 1], [], []>} : vector<16x32xf32>, vector<32x32xf32>, vector<16x32xf32> -> vector<16x32xf32>
    %37 = vector.extract_strided_slice %0 {offsets = [3, 0], sizes = [1, 32], strides = [1, 1]} : vector<8x32xf32> to vector<1x32xf32>
    %38 = vector.broadcast %37 : vector<1x32xf32> to vector<16x32xf32>
    %39 = arith.addf %36, %38 : vector<16x32xf32>
    %cst_18 = arith.constant 0.000000e+00 : f32
    %40 = vector.broadcast %cst_18 : f32 to vector<16x32xf32>
    %41 = arith.cmpf ogt, %39, %40 : vector<16x32xf32>
    %cst_19 = arith.constant 2.000000e-01 : f32
    %42 = vector.broadcast %cst_19 : f32 to vector<16x32xf32>
    %43 = arith.mulf %42, %39 : vector<16x32xf32>
    %44 = arith.select %41, %39, %43 : vector<16x32xi1>, vector<16x32xf32>
    %c64 = arith.constant 64 : index
    %c0_20 = arith.constant 0 : index
    %45 = vector.load %arg1[%c64, %c0_20] : memref<80x128xf32, #tpu.memory_space<vmem>>, vector<8x16xf32>
    %cst_21 = arith.constant dense<0.000000e+00> : vector<8x32xf32>
    %46 = tpu.matmul %45, %44, %cst_21 {dimension_numbers = #tpu.dot_dimension_numbers<[1], [0], [0], [1], [0, 0, 1, 1], [], []>} : vector<8x16xf32>, vector<16x32xf32>, vector<8x32xf32> -> vector<8x32xf32>
    %c104 = arith.constant 104 : index
    %c0_22 = arith.constant 0 : index
    %47 = vector.load %arg0[%c104, %c0_22] : memref<208x32xf32, #tpu.memory_space<vmem>>, vector<32x32xf32>
    %cst_23 = arith.constant dense<0.000000e+00> : vector<8x32xf32>
    %48 = tpu.matmul %46, %47, %cst_23 {dimension_numbers = #tpu.dot_dimension_numbers<[1], [0], [0], [1], [0, 0, 1, 1], [], []>} : vector<8x32xf32>, vector<32x32xf32>, vector<8x32xf32> -> vector<8x32xf32>
    %49 = vector.extract_strided_slice %0 {offsets = [4, 0], sizes = [1, 32], strides = [1, 1]} : vector<8x32xf32> to vector<1x32xf32>
    %50 = vector.broadcast %49 : vector<1x32xf32> to vector<8x32xf32>
    %51 = arith.addf %48, %50 : vector<8x32xf32>
    %cst_24 = arith.constant 0.000000e+00 : f32
    %52 = vector.broadcast %cst_24 : f32 to vector<8x32xf32>
    %53 = arith.maximumf %51, %52 : vector<8x32xf32>
    %c136 = arith.constant 136 : index
    %c0_25 = arith.constant 0 : index
    %54 = vector.load %arg0[%c136, %c0_25] : memref<208x32xf32, #tpu.memory_space<vmem>>, vector<32x32xf32>
    %cst_26 = arith.constant dense<0.000000e+00> : vector<8x32xf32>
    %55 = tpu.matmul %53, %54, %cst_26 {dimension_numbers = #tpu.dot_dimension_numbers<[1], [0], [0], [1], [0, 0, 1, 1], [], []>} : vector<8x32xf32>, vector<32x32xf32>, vector<8x32xf32> -> vector<8x32xf32>
    %56 = vector.extract_strided_slice %0 {offsets = [5, 0], sizes = [1, 32], strides = [1, 1]} : vector<8x32xf32> to vector<1x32xf32>
    %57 = vector.broadcast %56 : vector<1x32xf32> to vector<8x32xf32>
    %58 = arith.addf %55, %57 : vector<8x32xf32>
    %cst_27 = arith.constant 0.000000e+00 : f32
    %59 = vector.broadcast %cst_27 : f32 to vector<8x32xf32>
    %60 = arith.maximumf %58, %59 : vector<8x32xf32>
    %c168 = arith.constant 168 : index
    %c0_28 = arith.constant 0 : index
    %61 = vector.load %arg0[%c168, %c0_28] : memref<208x32xf32, #tpu.memory_space<vmem>>, vector<32x32xf32>
    %cst_29 = arith.constant dense<0.000000e+00> : vector<8x32xf32>
    %62 = tpu.matmul %60, %61, %cst_29 {dimension_numbers = #tpu.dot_dimension_numbers<[1], [0], [0], [1], [0, 0, 1, 1], [], []>} : vector<8x32xf32>, vector<32x32xf32>, vector<8x32xf32> -> vector<8x32xf32>
    %63 = vector.extract_strided_slice %0 {offsets = [6, 0], sizes = [1, 32], strides = [1, 1]} : vector<8x32xf32> to vector<1x32xf32>
    %64 = vector.broadcast %63 : vector<1x32xf32> to vector<8x32xf32>
    %65 = arith.addf %62, %64 : vector<8x32xf32>
    %c72_30 = arith.constant 72 : index
    %c0_31 = arith.constant 0 : index
    %66 = vector.load %arg1[%c72_30, %c0_31] : memref<80x128xf32, #tpu.memory_space<vmem>>, vector<8x32xf32>
    %67 = arith.addf %65, %66 : vector<8x32xf32>
    %68 = tpu.iota {dimensions = array<i32: 1>} : vector<8x32xi32>
    %cst_32 = arith.constant 0.000000e+00 : f32
    %69 = vector.broadcast %cst_32 : f32 to vector<8x32xf32>
    %70 = arith.cmpf oge, %67, %69 : vector<8x32xf32>
    %c28_i32 = arith.constant 28 : i32
    %71 = vector.broadcast %c28_i32 : i32 to vector<8x32xi32>
    %72 = arith.cmpi slt, %68, %71 : vector<8x32xi32>
    %73 = arith.andi %70, %72 : vector<8x32xi1>
    %cst_33 = arith.constant 1.000000e+00 : f32
    %cst_34 = arith.constant 0.000000e+00 : f32
    %74 = vector.broadcast %cst_33 : f32 to vector<8x32xf32>
    %75 = vector.broadcast %cst_34 : f32 to vector<8x32xf32>
    %76 = arith.select %73, %74, %75 : vector<8x32xi1>, vector<8x32xf32>
    %c0_35 = arith.constant 0 : index
    %c0_36 = arith.constant 0 : index
    %77 = vector.load %arg1[%c0_35, %c0_36] : memref<80x128xf32, #tpu.memory_space<vmem>>, vector<32x128xf32>
    %cst_37 = arith.constant dense<0.000000e+00> : vector<8x128xf32>
    %78 = tpu.matmul %76, %77, %cst_37 {dimension_numbers = #tpu.dot_dimension_numbers<[1], [0], [0], [1], [0, 0, 1, 1], [], []>} : vector<8x32xf32>, vector<32x128xf32>, vector<8x128xf32> -> vector<8x128xf32>
    %c0_38 = arith.constant 0 : index
    %c0_39 = arith.constant 0 : index
    %79 = vector.load %arg2[%c0_38, %c0_39] : memref<8x128xf32, #tpu.memory_space<vmem>>, vector<8x128xf32>
    tpu.vector_store %arg2[%c0_38, %c0_39], %78 {strides = array<i32>} : memref<8x128xf32, #tpu.memory_space<vmem>>, vector<8x128xf32>,
    return
  }
}

</mosaic_0001>

<llo_original>
// kernel: vae_forward.1
$region0: #{vae_forward.1}
  #allocation0 [shape = 'u32[]', space=smem, size = 0x4, offset = 0x4, fixed_abs, tag = 'smem constant byte address 0x4 - core index']
  #allocation1 [shape = 'u32[144,128]{1,0:T(1,128)}', space=vmem, size = 0x12000, scoped, tag = 'internal scratch']
  %s0 = inlined_call_operand.vmem [shape: f32[208,32], index: 0, kind: input, shape index: {}]
  %s1 = inlined_call_operand.vmem [shape: f32[80,128], index: 1, kind: input, shape index: {}]
  %s2 = inlined_call_operand.vmem [shape: f32[8,128], index: 2, kind: output, shape index: {}]
  %s3 = sld [smem:[#allocation0]]
  $region18: #{vae_forward.1} parent=0
    _
  %s5 = ssub.s32 1, %s3
  %s6 = scalar_select 0, %s5, %s3
  // Predicated region
  $region2: #{vae_forward.1} parent=0 // pred_check
    _
  $region3: #{vae_forward.1} parent=0 // pred_check_branch
    %8 = sbr.rel (0) target = $region5
  $region4: #{vae_forward.1} parent=0 // pred_region
    _
  $region5: #{vae_forward.1} parent=0 // pred_fallthru
    _
  // Predicated region
  $region6: #{vae_forward.1} parent=0 // pred_check
    _
  $region7: #{vae_forward.1} parent=0 // pred_check_branch
    %10 = sbr.rel (0) target = $region9
  $region8: #{vae_forward.1} parent=0 // pred_region
    _
  $region9: #{vae_forward.1} parent=0 // pred_fallthru
    _
  %v11 = vld [vmem:[%s0 + $0xc8] sm:$0xff]
  %v12 = vld [vmem:[%s1 + $0x30] sm:$0xff]
  %v13 = vld [vmem:[%s1 + $0x38] sm:$0xff]
  %v14 = vld [vmem:[%s1 + $0x20] sm:$0xff]
  %v15 = vld [vmem:[%s1 + $0x28] sm:$0xff]
  %vm16 = vcmask 130048
  %v18 = vsel %vm16, %v12, 0
  %v21 = vsel %vm16, %v13, 0
  %23 = vmatprep.subr.mxu0 0.0
  %24 = vmatpush1.msra.mxu0 %v14
  %25 = vmatprep.subr.mxu0 0.0
  %26 = vmatpush1.msra.mxu0 %v15
  %27 = vmatprep.subr.mxu0 0.0
  %28 = vmatpush1.msra.mxu0 0.0
  %29 = vmatprep.subr.mxu0 0.0
  %30 = vmatpush1.msra.mxu0 0.0
  %31 = vmatprep.subr.mxu0 0.0
  %32 = vmatpush1.msra.mxu0 0.0
  %33 = vmatprep.subr.mxu0 0.0
  %34 = vmatpush1.msra.mxu0 0.0
  %35 = vmatprep.subr.mxu0 0.0
  %36 = vmatpush1.msra.mxu0 0.0
  %37 = vmatprep.subr.mxu0 0.0
  %38 = vmatpush1.msra.mxu0 0.0
  %39 = vmatprep.subr.mxu0 0.0
  %40 = vmatpush1.msra.mxu0 0.0
  %41 = vmatprep.subr.mxu0 0.0
  %42 = vmatpush1.msra.mxu0 0.0
  %43 = vmatprep.subr.mxu0 0.0
  %44 = vmatpush1.msra.mxu0 0.0
  %45 = vmatprep.subr.mxu0 0.0
  %46 = vmatpush1.msra.mxu0 0.0
  %47 = vmatprep.subr.mxu0 0.0
  %48 = vmatpush1.msra.mxu0 0.0
  %49 = vmatprep.subr.mxu0 0.0
  %50 = vmatpush1.msra.mxu0 0.0
  %51 = vmatprep.subr.mxu0 0.0
  %52 = vmatpush1.msra.mxu0 0.0
  %53 = vmatprep.subr.mxu0 0.0
  %54 = vmatpush1.msra.mxu0 0.0
  %55 = vmatprep.subr.mxu0 0.0
  %56 = vmatpush1.msra.mxu0 0.0
  %57 = vmatprep.subr.mxu0 0.0
  %58 = vmatpush1.msra.mxu0 0.0
  %59 = vmatprep.subr.mxu0 0.0
  %60 = vmatpush1.msra.mxu0 0.0
  %61 = vmatprep.subr.mxu0 0.0
  %62 = vmatpush1.msra.mxu0 0.0
  %63 = vmatprep.subr.mxu0 0.0
  %64 = vmatpush1.msra.mxu0 0.0
  %65 = vmatprep.subr.mxu0 0.0
  %66 = vmatpush1.msra.mxu0 0.0
  %67 = vmatprep.subr.mxu0 0.0
  %68 = vmatpush1.msra.mxu0 0.0
  %69 = vmatprep.subr.mxu0 0.0
  %70 = vmatpush1.msra.mxu0 0.0
  %71 = vmatprep.subr.mxu0 0.0
  %72 = vmatpush1.msra.mxu0 0.0
  %73 = vmatprep.subr.mxu0 0.0
  %74 = vmatpush1.msra.mxu0 0.0
  %75 = vmatprep.subr.mxu0 0.0
  %76 = vmatpush1.msra.mxu0 0.0
  %77 = vmatprep.subr.mxu0 0.0
  %78 = vmatpush1.msra.mxu0 0.0
  %79 = vmatprep.subr.mxu0 0.0
  %80 = vmatpush1.msra.mxu0 0.0
  %81 = vmatprep.subr.mxu0 0.0
  %82 = vmatpush1.msra.mxu0 0.0
  %83 = vmatprep.subr.mxu0 0.0
  %84 = vmatpush1.msra.mxu0 0.0
  %85 = vmatprep.subr.mxu0 0.0
  %86 = vmatpush1.msra.mxu0 0.0
  %87 = vmatprep.mubr.f32.mxu0 0.0
  %88 = vmatmul.mubr.f32.gmra.mrb[0].mxu0 %v18
  %v89 = vpop.f32.mrb[0].mxu0
  %v90 = vadd.f32 0.0, %v89
  %v91 = vpop.f32.mrb[0].mxu0
  %92 = vmatprep.mubr.f32.mxu0 0.0
  %93 = vmatmul.mubr.f32.gmra.mrb[0].mxu0 %v21
  %v94 = vpop.f32.mrb[0].mxu0
  %v95 = vadd.f32 0.0, %v94
  %v96 = vpop.f32.mrb[0].mxu0
  %97 = vdwg.mxu0
  %v98 = vld [vmem:[%s0] sm:$0xff]
  %v99 = vlaneseq
  %v100 = vshrl.u32 %v99, 7
  %v101 = vsub.s32 0, %v100
  %v102 = vrot.slane %v11, %v101
  %vm103 = vcmask 64512
  %v105 = vsel %vm103, %v90, 0
  %v108 = vsel %vm103, %v95, 0
  %110 = vmatprep.subr.mxu0 0.0
  %111 = vmatpush1.msra.mxu0 %v98
  %112 = vmatprep.subr.mxu0 0.0
  %113 = vmatpush1.msra.mxu0 0.0
  %114 = vmatprep.subr.mxu0 0.0
  %115 = vmatpush1.msra.mxu0 0.0
  %116 = vmatprep.subr.mxu0 0.0
  %117 = vmatpush1.msra.mxu0 0.0
  %118 = vmatprep.subr.mxu0 0.0
  %119 = vmatpush1.msra.mxu0 0.0
  %120 = vmatprep.subr.mxu0 0.0
  %121 = vmatpush1.msra.mxu0 0.0
  %122 = vmatprep.subr.mxu0 0.0
  %123 = vmatpush1.msra.mxu0 0.0
  %124 = vmatprep.subr.mxu0 0.0
  %125 = vmatpush1.msra.mxu0 0.0
  %126 = vmatprep.subr.mxu0 0.0
  %127 = vmatpush1.msra.mxu0 0.0
  %128 = vmatprep.subr.mxu0 0.0
  %129 = vmatpush1.msra.mxu0 0.0
  %130 = vmatprep.subr.mxu0 0.0
  %131 = vmatpush1.msra.mxu0 0.0
  %132 = vmatprep.subr.mxu0 0.0
  %133 = vmatpush1.msra.mxu0 0.0
  %134 = vmatprep.subr.mxu0 0.0
  %135 = vmatpush1.msra.mxu0 0.0
  %136 = vmatprep.subr.mxu0 0.0
  %137 = vmatpush1.msra.mxu0 0.0
  %138 = vmatprep.subr.mxu0 0.0
  %139 = vmatpush1.msra.mxu0 0.0
  %140 = vmatprep.subr.mxu0 0.0
  %141 = vmatpush1.msra.mxu0 0.0
  %142 = vmatprep.subr.mxu0 0.0
  %143 = vmatpush1.msra.mxu0 0.0
  %144 = vmatprep.subr.mxu0 0.0
  %145 = vmatpush1.msra.mxu0 0.0
  %146 = vmatprep.subr.mxu0 0.0
  %147 = vmatpush1.msra.mxu0 0.0
  %148 = vmatprep.subr.mxu0 0.0
  %149 = vmatpush1.msra.mxu0 0.0
  %150 = vmatprep.subr.mxu0 0.0
  %151 = vmatpush1.msra.mxu0 0.0
  %152 = vmatprep.subr.mxu0 0.0
  %153 = vmatpush1.msra.mxu0 0.0
  %154 = vmatprep.subr.mxu0 0.0
  %155 = vmatpush1.msra.mxu0 0.0
  %156 = vmatprep.subr.mxu0 0.0
  %157 = vmatpush1.msra.mxu0 0.0
  %158 = vmatprep.subr.mxu0 0.0
  %159 = vmatpush1.msra.mxu0 0.0
  %160 = vmatprep.subr.mxu0 0.0
  %161 = vmatpush1.msra.mxu0 0.0
  %162 = vmatprep.subr.mxu0 0.0
  %163 = vmatpush1.msra.mxu0 0.0
  %164 = vmatprep.subr.mxu0 0.0
  %165 = vmatpush1.msra.mxu0 0.0
  %166 = vmatprep.subr.mxu0 0.0
  %167 = vmatpush1.msra.mxu0 0.0
  %168 = vmatprep.subr.mxu0 0.0
  %169 = vmatpush1.msra.mxu0 0.0
  %170 = vmatprep.subr.mxu0 0.0
  %171 = vmatpush1.msra.mxu0 0.0
  %172 = vmatprep.subr.mxu0 0.0
  %173 = vmatpush1.msra.mxu0 0.0
  %174 = vmatprep.mubr.f32.mxu0 0.0
  %175 = vmatmul.mubr.f32.gmra.mrb[0].mxu0 %v105
  %v176 = vpop.f32.mrb[0].mxu0
  %v177 = vadd.f32 %v102, %v176
  %v178 = vpop.f32.mrb[0].mxu0
  %179 = vmatprep.mubr.f32.mxu0 0.0
  %180 = vmatmul.mubr.f32.gmra.mrb[0].mxu0 %v108
  %v181 = vpop.f32.mrb[0].mxu0
  %v182 = vadd.f32 %v102, %v181
  %v183 = vpop.f32.mrb[0].mxu0
  %184 = vdwg.mxu0
  %vm185 = vcmp.gt.f32.partialorder %v177, 0.0
  %vm186 = vcmp.gt.f32.partialorder %v182, 0.0
  %v187 = vmul.f32 %v177, 0.2
  %v188 = vmul.f32 %v182, 0.2
  %v189 = vsel %vm185, %v177, %v187
  %v190 = vsel %vm186, %v182, %v188
  %v191 = vld [vmem:[%s0 + $0x8] sm:$0xff]
  %v192 = vld [vmem:[%s0 + $0x10] sm:$0xff]
  %v193 = vld [vmem:[%s0 + $0x18] sm:$0xff]
  %v194 = vld [vmem:[%s0 + $0x20] sm:$0xff]
  %v195 = vlaneseq
  %v196 = vshrl.u32 %v195, 7
  %v197 = vsub.s32 1, %v196
  %v198 = vrot.slane %v11, %v197
  %vm199 = vcmask 261120
  %v201 = vsel %vm199, %v189, 0
  %v204 = vsel %vm199, %v190, 0
  %206 = vmatprep.subr.mxu0 0.0
  %207 = vmatpush1.msra.mxu0 %v191
  %208 = vmatprep.subr.mxu0 0.0
  %209 = vmatpush1.msra.mxu0 %v192
  %210 = vmatprep.subr.mxu0 0.0
  %211 = vmatpush1.msra.mxu0 %v193
  %212 = vmatprep.subr.mxu0 0.0
  %213 = vmatpush1.msra.mxu0 %v194
  %214 = vmatprep.subr.mxu0 0.0
  %215 = vmatpush1.msra.mxu0 0.0
  %216 = vmatprep.subr.mxu0 0.0
  %217 = vmatpush1.msra.mxu0 0.0
  %218 = vmatprep.subr.mxu0 0.0
  %219 = vmatpush1.msra.mxu0 0.0
  %220 = vmatprep.subr.mxu0 0.0
  %221 = vmatpush1.msra.mxu0 0.0
  %222 = vmatprep.subr.mxu0 0.0
  %223 = vmatpush1.msra.mxu0 0.0
  %224 = vmatprep.subr.mxu0 0.0
  %225 = vmatpush1.msra.mxu0 0.0
  %226 = vmatprep.subr.mxu0 0.0
  %227 = vmatpush1.msra.mxu0 0.0
  %228 = vmatprep.subr.mxu0 0.0
  %229 = vmatpush1.msra.mxu0 0.0
  %230 = vmatprep.subr.mxu0 0.0
  %231 = vmatpush1.msra.mxu0 0.0
  %232 = vmatprep.subr.mxu0 0.0
  %233 = vmatpush1.msra.mxu0 0.0
  %234 = vmatprep.subr.mxu0 0.0
  %235 = vmatpush1.msra.mxu0 0.0
  %236 = vmatprep.subr.mxu0 0.0
  %237 = vmatpush1.msra.mxu0 0.0
  %238 = vmatprep.subr.mxu0 0.0
  %239 = vmatpush1.msra.mxu0 0.0
  %240 = vmatprep.subr.mxu0 0.0
  %241 = vmatpush1.msra.mxu0 0.0
  %242 = vmatprep.subr.mxu0 0.0
  %243 = vmatpush1.msra.mxu0 0.0
  %244 = vmatprep.subr.mxu0 0.0
  %245 = vmatpush1.msra.mxu0 0.0
  %246 = vmatprep.subr.mxu0 0.0
  %247 = vmatpush1.msra.mxu0 0.0
  %248 = vmatprep.subr.mxu0 0.0
  %249 = vmatpush1.msra.mxu0 0.0
  %250 = vmatprep.subr.mxu0 0.0
  %251 = vmatpush1.msra.mxu0 0.0
  %252 = vmatprep.subr.mxu0 0.0
  %253 = vmatpush1.msra.mxu0 0.0
  %254 = vmatprep.subr.mxu0 0.0
  %255 = vmatpush1.msra.mxu0 0.0
  %256 = vmatprep.subr.mxu0 0.0
  %257 = vmatpush1.msra.mxu0 0.0
  %258 = vmatprep.subr.mxu0 0.0
  %259 = vmatpush1.msra.mxu0 0.0
  %260 = vmatprep.subr.mxu0 0.0
  %261 = vmatpush1.msra.mxu0 0.0
  %262 = vmatprep.subr.mxu0 0.0
  %263 = vmatpush1.msra.mxu0 0.0
  %264 = vmatprep.subr.mxu0 0.0
  %265 = vmatpush1.msra.mxu0 0.0
  %266 = vmatprep.subr.mxu0 0.0
  %267 = vmatpush1.msra.mxu0 0.0
  %268 = vmatprep.subr.mxu0 0.0
  %269 = vmatpush1.msra.mxu0 0.0
  %270 = vmatprep.mubr.f32.mxu0 0.0
  %271 = vmatmul.mubr.f32.gmra.mrb[0].mxu0 %v201
  %v272 = vpop.f32.mrb[0].mxu0
  %v273 = vadd.f32 %v198, %v272
  %v274 = vpop.f32.mrb[0].mxu0
  %275 = vmatprep.mubr.f32.mxu0 0.0
  %276 = vmatmul.mubr.f32.gmra.mrb[0].mxu0 %v204
  %v277 = vpop.f32.mrb[0].mxu0
  %v278 = vadd.f32 %v198, %v277
  %v279 = vpop.f32.mrb[0].mxu0
  %280 = vdwg.mxu0
  %vm281 = vcmp.gt.f32.partialorder %v273, 0.0
  %vm282 = vcmp.gt.f32.partialorder %v278, 0.0
  %v283 = vmul.f32 %v273, 0.2
  %v284 = vmul.f32 %v278, 0.2
  %v285 = vsel %vm281, %v273, %v283
  %v286 = vsel %vm282, %v278, %v284
  %287 = vmatprep.subr.mxu0 0.0
  %288 = vmatpush1.msra.mxu0 %v285
  %289 = vmatprep.subr.mxu0 0.0
  %290 = vmatpush1.msra.mxu0 %v286
  %291 = vmatprep.subr.mxu0 0.0
  %292 = vmatpush1.msra.mxu0 0.0
  %293 = vmatprep.subr.mxu0 0.0
  %294 = vmatpush1.msra.mxu0 0.0
  %295 = vmatprep.subr.mxu0 0.0
  %296 = vmatpush1.msra.mxu0 0.0
  %297 = vmatprep.subr.mxu0 0.0
  %298 = vmatpush1.msra.mxu0 0.0
  %299 = vmatprep.subr.mxu0 0.0
  %300 = vmatpush1.msra.mxu0 0.0
  %301 = vmatprep.subr.mxu0 0.0
  %302 = vmatpush1.msra.mxu0 0.0
  %303 = vmatprep.subr.mxu0 0.0
  %304 = vmatpush1.msra.mxu0 0.0
  %305 = vmatprep.subr.mxu0 0.0
  %306 = vmatpush1.msra.mxu0 0.0
  %307 = vmatprep.subr.mxu0 0.0
  %308 = vmatpush1.msra.mxu0 0.0
  %309 = vmatprep.subr.mxu0 0.0
  %310 = vmatpush1.msra.mxu0 0.0
  %311 = vmatprep.subr.mxu0 0.0
  %312 = vmatpush1.msra.mxu0 0.0
  %313 = vmatprep.subr.mxu0 0.0
  %314 = vmatpush1.msra.mxu0 0.0
  %315 = vmatprep.subr.mxu0 0.0
  %316 = vmatpush1.msra.mxu0 0.0
  %317 = vmatprep.subr.mxu0 0.0
  %318 = vmatpush1.msra.mxu0 0.0
  %319 = vmatprep.subr.mxu0 0.0
  %320 = vmatpush1.msra.mxu0 0.0
  %321 = vmatprep.subr.mxu0 0.0
  %322 = vmatpush1.msra.mxu0 0.0
  %323 = vmatprep.subr.mxu0 0.0
  %324 = vmatpush1.msra.mxu0 0.0
  %325 = vmatprep.subr.mxu0 0.0
  %326 = vmatpush1.msra.mxu0 0.0
  %327 = vmatprep.subr.mxu0 0.0
  %328 = vmatpush1.msra.mxu0 0.0
  %329 = vmatprep.subr.mxu0 0.0
  %330 = vmatpush1.msra.mxu0 0.0
  %331 = vmatprep.subr.mxu0 0.0
  %332 = vmatpush1.msra.mxu0 0.0
  %333 = vmatprep.subr.mxu0 0.0
  %334 = vmatpush1.msra.mxu0 0.0
  %335 = vmatprep.subr.mxu0 0.0
  %336 = vmatpush1.msra.mxu0 0.0
  %337 = vmatprep.subr.mxu0 0.0
  %338 = vmatpush1.msra.mxu0 0.0
  %339 = vmatprep.subr.mxu0 0.0
  %340 = vmatpush1.msra.mxu0 0.0
  %341 = vmatprep.subr.mxu0 0.0
  %342 = vmatpush1.msra.mxu0 0.0
  %343 = vmatprep.subr.mxu0 0.0
  %344 = vmatpush1.msra.mxu0 0.0
  %345 = vmatprep.subr.mxu0 0.0
  %346 = vmatpush1.msra.mxu0 0.0
  %347 = vmatprep.subr.mxu0 0.0
  %348 = vmatpush1.msra.mxu0 0.0
  %349 = vmatprep.subr.mxu0 0.0
  %350 = vmatpush1.msra.mxu0 0.0
  %351 = vmatprep.mubr.f32.mxu0 0.0
  %352 = vmatmul.mubr.f32.gmra.mrb[0].mxu0 %v18
  %v353 = vpop.f32.mrb[0].mxu0
  %v354 = vadd.f32 0.0, %v353
  %v355 = vpop.f32.mrb[0].mxu0
  %356 = vmatprep.mubr.f32.mxu0 0.0
  %357 = vmatmul.mubr.f32.gmra.mrb[0].mxu0 %v21
  %v358 = vpop.f32.mrb[0].mxu0
  %v359 = vadd.f32 0.0, %v358
  %v360 = vpop.f32.mrb[0].mxu0
  %361 = vdwg.mxu0
  %v362 = vld [vmem:[%s0 + $0x28] sm:$0xff]
  %v363 = vld [vmem:[%s0 + $0x30] sm:$0xff]
  %v364 = vld [vmem:[%s0 + $0x38] sm:$0xff]
  %v365 = vld [vmem:[%s0 + $0x40] sm:$0xff]
  %v366 = vlaneseq
  %v367 = vshrl.u32 %v366, 7
  %v368 = vsub.s32 2, %v367
  %v369 = vrot.slane %v11, %v368
  %v371 = vsel %vm199, %v354, 0
  %v374 = vsel %vm199, %v359, 0
  %376 = vmatprep.subr.mxu0 0.0
  %377 = vmatpush1.msra.mxu0 %v362
  %378 = vmatprep.subr.mxu0 0.0
  %379 = vmatpush1.msra.mxu0 %v363
  %380 = vmatprep.subr.mxu0 0.0
  %381 = vmatpush1.msra.mxu0 %v364
  %382 = vmatprep.subr.mxu0 0.0
  %383 = vmatpush1.msra.mxu0 %v365
  %384 = vmatprep.subr.mxu0 0.0
  %385 = vmatpush1.msra.mxu0 0.0
  %386 = vmatprep.subr.mxu0 0.0
  %387 = vmatpush1.msra.mxu0 0.0
  %388 = vmatprep.subr.mxu0 0.0
  %389 = vmatpush1.msra.mxu0 0.0
  %390 = vmatprep.subr.mxu0 0.0
  %391 = vmatpush1.msra.mxu0 0.0
  %392 = vmatprep.subr.mxu0 0.0
  %393 = vmatpush1.msra.mxu0 0.0
  %394 = vmatprep.subr.mxu0 0.0
  %395 = vmatpush1.msra.mxu0 0.0
  %396 = vmatprep.subr.mxu0 0.0
  %397 = vmatpush1.msra.mxu0 0.0
  %398 = vmatprep.subr.mxu0 0.0
  %399 = vmatpush1.msra.mxu0 0.0
  %400 = vmatprep.subr.mxu0 0.0
  %401 = vmatpush1.msra.mxu0 0.0
  %402 = vmatprep.subr.mxu0 0.0
  %403 = vmatpush1.msra.mxu0 0.0
  %404 = vmatprep.subr.mxu0 0.0
  %405 = vmatpush1.msra.mxu0 0.0
  %406 = vmatprep.subr.mxu0 0.0
  %407 = vmatpush1.msra.mxu0 0.0
  %408 = vmatprep.subr.mxu0 0.0
  %409 = vmatpush1.msra.mxu0 0.0
  %410 = vmatprep.subr.mxu0 0.0
  %411 = vmatpush1.msra.mxu0 0.0
  %412 = vmatprep.subr.mxu0 0.0
  %413 = vmatpush1.msra.mxu0 0.0
  %414 = vmatprep.subr.mxu0 0.0
  %415 = vmatpush1.msra.mxu0 0.0
  %416 = vmatprep.subr.mxu0 0.0
  %417 = vmatpush1.msra.mxu0 0.0
  %418 = vmatprep.subr.mxu0 0.0
  %419 = vmatpush1.msra.mxu0 0.0
  %420 = vmatprep.subr.mxu0 0.0
  %421 = vmatpush1.msra.mxu0 0.0
  %422 = vmatprep.subr.mxu0 0.0
  %423 = vmatpush1.msra.mxu0 0.0
  %424 = vmatprep.subr.mxu0 0.0
  %425 = vmatpush1.msra.mxu0 0.0
  %426 = vmatprep.subr.mxu0 0.0
  %427 = vmatpush1.msra.mxu0 0.0
  %428 = vmatprep.subr.mxu0 0.0
  %429 = vmatpush1.msra.mxu0 0.0
  %430 = vmatprep.subr.mxu0 0.0
  %431 = vmatpush1.msra.mxu0 0.0
  %432 = vmatprep.subr.mxu0 0.0
  %433 = vmatpush1.msra.mxu0 0.0
  %434 = vmatprep.subr.mxu0 0.0
  %435 = vmatpush1.msra.mxu0 0.0
  %436 = vmatprep.subr.mxu0 0.0
  %437 = vmatpush1.msra.mxu0 0.0
  %438 = vmatprep.subr.mxu0 0.0
  %439 = vmatpush1.msra.mxu0 0.0
  %440 = vmatprep.mubr.f32.mxu0 0.0
  %441 = vmatmul.mubr.f32.gmra.mrb[0].mxu0 %v371
  %v442 = vpop.f32.mrb[0].mxu0
  %v443 = vadd.f32 %v369, %v442
  %v444 = vpop.f32.mrb[0].mxu0
  %445 = vmatprep.mubr.f32.mxu0 0.0
  %446 = vmatmul.mubr.f32.gmra.mrb[0].mxu0 %v374
  %v447 = vpop.f32.mrb[0].mxu0
  %v448 = vadd.f32 %v369, %v447
  %v449 = vpop.f32.mrb[0].mxu0
  %450 = vdwg.mxu0
  %vm451 = vcmp.gt.f32.partialorder %v443, 0.0
  %vm452 = vcmp.gt.f32.partialorder %v448, 0.0
  %v453 = vmul.f32 %v443, 0.2
  %v454 = vmul.f32 %v448, 0.2
  %v455 = vsel %vm451, %v443, %v453
  %v456 = vsel %vm452, %v448, %v454
  %v457 = vld [vmem:[%s0 + $0x48] sm:$0xff]
  %v458 = vld [vmem:[%s0 + $0x50] sm:$0xff]
  %v459 = vld [vmem:[%s0 + $0x58] sm:$0xff]
  %v460 = vld [vmem:[%s0 + $0x60] sm:$0xff]
  %v461 = vlaneseq
  %v462 = vshrl.u32 %v461, 7
  %v463 = vsub.s32 3, %v462
  %v464 = vrot.slane %v11, %v463
  %v466 = vsel %vm199, %v455, 0
  %v469 = vsel %vm199, %v456, 0
  %471 = vmatprep.subr.mxu0 0.0
  %472 = vmatpush1.msra.mxu0 %v457
  %473 = vmatprep.subr.mxu0 0.0
  %474 = vmatpush1.msra.mxu0 %v458
  %475 = vmatprep.subr.mxu0 0.0
  %476 = vmatpush1.msra.mxu0 %v459
  %477 = vmatprep.subr.mxu0 0.0
  %478 = vmatpush1.msra.mxu0 %v460
  %479 = vmatprep.subr.mxu0 0.0
  %480 = vmatpush1.msra.mxu0 0.0
  %481 = vmatprep.subr.mxu0 0.0
  %482 = vmatpush1.msra.mxu0 0.0
  %483 = vmatprep.subr.mxu0 0.0
  %484 = vmatpush1.msra.mxu0 0.0
  %485 = vmatprep.subr.mxu0 0.0
  %486 = vmatpush1.msra.mxu0 0.0
  %487 = vmatprep.subr.mxu0 0.0
  %488 = vmatpush1.msra.mxu0 0.0
  %489 = vmatprep.subr.mxu0 0.0
  %490 = vmatpush1.msra.mxu0 0.0
  %491 = vmatprep.subr.mxu0 0.0
  %492 = vmatpush1.msra.mxu0 0.0
  %493 = vmatprep.subr.mxu0 0.0
  %494 = vmatpush1.msra.mxu0 0.0
  %495 = vmatprep.subr.mxu0 0.0
  %496 = vmatpush1.msra.mxu0 0.0
  %497 = vmatprep.subr.mxu0 0.0
  %498 = vmatpush1.msra.mxu0 0.0
  %499 = vmatprep.subr.mxu0 0.0
  %500 = vmatpush1.msra.mxu0 0.0
  %501 = vmatprep.subr.mxu0 0.0
  %502 = vmatpush1.msra.mxu0 0.0
  %503 = vmatprep.subr.mxu0 0.0
  %504 = vmatpush1.msra.mxu0 0.0
  %505 = vmatprep.subr.mxu0 0.0
  %506 = vmatpush1.msra.mxu0 0.0
  %507 = vmatprep.subr.mxu0 0.0
  %508 = vmatpush1.msra.mxu0 0.0
  %509 = vmatprep.subr.mxu0 0.0
  %510 = vmatpush1.msra.mxu0 0.0
  %511 = vmatprep.subr.mxu0 0.0
  %512 = vmatpush1.msra.mxu0 0.0
  %513 = vmatprep.subr.mxu0 0.0
  %514 = vmatpush1.msra.mxu0 0.0
  %515 = vmatprep.subr.mxu0 0.0
  %516 = vmatpush1.msra.mxu0 0.0
  %517 = vmatprep.subr.mxu0 0.0
  %518 = vmatpush1.msra.mxu0 0.0
  %519 = vmatprep.subr.mxu0 0.0
  %520 = vmatpush1.msra.mxu0 0.0
  %521 = vmatprep.subr.mxu0 0.0
  %522 = vmatpush1.msra.mxu0 0.0
  %523 = vmatprep.subr.mxu0 0.0
  %524 = vmatpush1.msra.mxu0 0.0
  %525 = vmatprep.subr.mxu0 0.0
  %526 = vmatpush1.msra.mxu0 0.0
  %527 = vmatprep.subr.mxu0 0.0
  %528 = vmatpush1.msra.mxu0 0.0
  %529 = vmatprep.subr.mxu0 0.0
  %530 = vmatpush1.msra.mxu0 0.0
  %531 = vmatprep.subr.mxu0 0.0
  %532 = vmatpush1.msra.mxu0 0.0
  %533 = vmatprep.subr.mxu0 0.0
  %534 = vmatpush1.msra.mxu0 0.0
  %535 = vmatprep.mubr.f32.mxu0 0.0
  %536 = vmatmul.mubr.f32.gmra.mrb[0].mxu0 %v466
  %v537 = vpop.f32.mrb[0].mxu0
  %v538 = vadd.f32 %v464, %v537
  %v539 = vpop.f32.mrb[0].mxu0
  %540 = vmatprep.mubr.f32.mxu0 0.0
  %541 = vmatmul.mubr.f32.gmra.mrb[0].mxu0 %v469
  %v542 = vpop.f32.mrb[0].mxu0
  %v543 = vadd.f32 %v464, %v542
  %v544 = vpop.f32.mrb[0].mxu0
  %545 = vdwg.mxu0
  %vm546 = vcmp.gt.f32.partialorder %v538, 0.0
  %vm547 = vcmp.gt.f32.partialorder %v543, 0.0
  %v548 = vmul.f32 %v538, 0.2
  %v549 = vmul.f32 %v543, 0.2
  %v550 = vsel %vm546, %v538, %v548
  %v551 = vsel %vm547, %v543, %v549
  %v552 = vld [vmem:[%s1 + $0x40] sm:$0xff]
  %v554 = vsel %vm16, %v552, 0
  %556 = vmatprep.subr.mxu0 0.0
  %557 = vmatpush1.msra.mxu0 %v550
  %558 = vmatprep.subr.mxu0 0.0
  %559 = vmatpush1.msra.mxu0 %v551
  %560 = vmatprep.subr.mxu0 0.0
  %561 = vmatpush1.msra.mxu0 0.0
  %562 = vmatprep.subr.mxu0 0.0
  %563 = vmatpush1.msra.mxu0 0.0
  %564 = vmatprep.subr.mxu0 0.0
  %565 = vmatpush1.msra.mxu0 0.0
  %566 = vmatprep.subr.mxu0 0.0
  %567 = vmatpush1.msra.mxu0 0.0
  %568 = vmatprep.subr.mxu0 0.0
  %569 = vmatpush1.msra.mxu0 0.0
  %570 = vmatprep.subr.mxu0 0.0
  %571 = vmatpush1.msra.mxu0 0.0
  %572 = vmatprep.subr.mxu0 0.0
  %573 = vmatpush1.msra.mxu0 0.0
  %574 = vmatprep.subr.mxu0 0.0
  %575 = vmatpush1.msra.mxu0 0.0
  %576 = vmatprep.subr.mxu0 0.0
  %577 = vmatpush1.msra.mxu0 0.0
  %578 = vmatprep.subr.mxu0 0.0
  %579 = vmatpush1.msra.mxu0 0.0
  %580 = vmatprep.subr.mxu0 0.0
  %581 = vmatpush1.msra.mxu0 0.0
  %582 = vmatprep.subr.mxu0 0.0
  %583 = vmatpush1.msra.mxu0 0.0
  %584 = vmatprep.subr.mxu0 0.0
  %585 = vmatpush1.msra.mxu0 0.0
  %586 = vmatprep.subr.mxu0 0.0
  %587 = vmatpush1.msra.mxu0 0.0
  %588 = vmatprep.subr.mxu0 0.0
  %589 = vmatpush1.msra.mxu0 0.0
  %590 = vmatprep.subr.mxu0 0.0
  %591 = vmatpush1.msra.mxu0 0.0
  %592 = vmatprep.subr.mxu0 0.0
  %593 = vmatpush1.msra.mxu0 0.0
  %594 = vmatprep.subr.mxu0 0.0
  %595 = vmatpush1.msra.mxu0 0.0
  %596 = vmatprep.subr.mxu0 0.0
  %597 = vmatpush1.msra.mxu0 0.0
  %598 = vmatprep.subr.mxu0 0.0
  %599 = vmatpush1.msra.mxu0 0.0
  %600 = vmatprep.subr.mxu0 0.0
  %601 = vmatpush1.msra.mxu0 0.0
  %602 = vmatprep.subr.mxu0 0.0
  %603 = vmatpush1.msra.mxu0 0.0
  %604 = vmatprep.subr.mxu0 0.0
  %605 = vmatpush1.msra.mxu0 0.0
  %606 = vmatprep.subr.mxu0 0.0
  %607 = vmatpush1.msra.mxu0 0.0
  %608 = vmatprep.subr.mxu0 0.0
  %609 = vmatpush1.msra.mxu0 0.0
  %610 = vmatprep.subr.mxu0 0.0
  %611 = vmatpush1.msra.mxu0 0.0
  %612 = vmatprep.subr.mxu0 0.0
  %613 = vmatpush1.msra.mxu0 0.0
  %614 = vmatprep.subr.mxu0 0.0
  %615 = vmatpush1.msra.mxu0 0.0
  %616 = vmatprep.subr.mxu0 0.0
  %617 = vmatpush1.msra.mxu0 0.0
  %618 = vmatprep.subr.mxu0 0.0
  %619 = vmatpush1.msra.mxu0 0.0
  %620 = vmatprep.mubr.f32.mxu0 0.0
  %621 = vmatmul.mubr.f32.gmra.mrb[0].mxu0 %v554
  %v622 = vpop.f32.mrb[0].mxu0
  %v623 = vadd.f32 0.0, %v622
  %v624 = vpop.f32.mrb[0].mxu0
  %625 = vdwg.mxu0
  %v626 = vld [vmem:[%s0 + $0x68] sm:$0xff]
  %v627 = vld [vmem:[%s0 + $0x70] sm:$0xff]
  %v628 = vld [vmem:[%s0 + $0x78] sm:$0xff]
  %v629 = vld [vmem:[%s0 + $0x80] sm:$0xff]
  %v630 = vlaneseq
  %v631 = vshrl.u32 %v630, 7
  %v632 = vsub.s32 4, %v631
  %v633 = vrot.slane %v11, %v632
  %v635 = vsel %vm199, %v623, 0
  %637 = vmatprep.subr.mxu0 0.0
  %638 = vmatpush1.msra.mxu0 %v626
  %639 = vmatprep.subr.mxu0 0.0
  %640 = vmatpush1.msra.mxu0 %v627
  %641 = vmatprep.subr.mxu0 0.0
  %642 = vmatpush1.msra.mxu0 %v628
  %643 = vmatprep.subr.mxu0 0.0
  %644 = vmatpush1.msra.mxu0 %v629
  %645 = vmatprep.subr.mxu0 0.0
  %646 = vmatpush1.msra.mxu0 0.0
  %647 = vmatprep.subr.mxu0 0.0
  %648 = vmatpush1.msra.mxu0 0.0
  %649 = vmatprep.subr.mxu0 0.0
  %650 = vmatpush1.msra.mxu0 0.0
  %651 = vmatprep.subr.mxu0 0.0
  %652 = vmatpush1.msra.mxu0 0.0
  %653 = vmatprep.subr.mxu0 0.0
  %654 = vmatpush1.msra.mxu0 0.0
  %655 = vmatprep.subr.mxu0 0.0
  %656 = vmatpush1.msra.mxu0 0.0
  %657 = vmatprep.subr.mxu0 0.0
  %658 = vmatpush1.msra.mxu0 0.0
  %659 = vmatprep.subr.mxu0 0.0
  %660 = vmatpush1.msra.mxu0 0.0
  %661 = vmatprep.subr.mxu0 0.0
  %662 = vmatpush1.msra.mxu0 0.0
  %663 = vmatprep.subr.mxu0 0.0
  %664 = vmatpush1.msra.mxu0 0.0
  %665 = vmatprep.subr.mxu0 0.0
  %666 = vmatpush1.msra.mxu0 0.0
  %667 = vmatprep.subr.mxu0 0.0
  %668 = vmatpush1.msra.mxu0 0.0
  %669 = vmatprep.subr.mxu0 0.0
  %670 = vmatpush1.msra.mxu0 0.0
  %671 = vmatprep.subr.mxu0 0.0
  %672 = vmatpush1.msra.mxu0 0.0
  %673 = vmatprep.subr.mxu0 0.0
  %674 = vmatpush1.msra.mxu0 0.0
  %675 = vmatprep.subr.mxu0 0.0
  %676 = vmatpush1.msra.mxu0 0.0
  %677 = vmatprep.subr.mxu0 0.0
  %678 = vmatpush1.msra.mxu0 0.0
  %679 = vmatprep.subr.mxu0 0.0
  %680 = vmatpush1.msra.mxu0 0.0
  %681 = vmatprep.subr.mxu0 0.0
  %682 = vmatpush1.msra.mxu0 0.0
  %683 = vmatprep.subr.mxu0 0.0
  %684 = vmatpush1.msra.mxu0 0.0
  %685 = vmatprep.subr.mxu0 0.0
  %686 = vmatpush1.msra.mxu0 0.0
  %687 = vmatprep.subr.mxu0 0.0
  %688 = vmatpush1.msra.mxu0 0.0
  %689 = vmatprep.subr.mxu0 0.0
  %690 = vmatpush1.msra.mxu0 0.0
  %691 = vmatprep.subr.mxu0 0.0
  %692 = vmatpush1.msra.mxu0 0.0
  %693 = vmatprep.subr.mxu0 0.0
  %694 = vmatpush1.msra.mxu0 0.0
  %695 = vmatprep.subr.mxu0 0.0
  %696 = vmatpush1.msra.mxu0 0.0
  %697 = vmatprep.subr.mxu0 0.0
  %698 = vmatpush1.msra.mxu0 0.0
  %699 = vmatprep.subr.mxu0 0.0
  %700 = vmatpush1.msra.mxu0 0.0
  %701 = vmatprep.mubr.f32.mxu0 0.0
  %702 = vmatmul.mubr.f32.gmra.mrb[0].mxu0 %v635
  %v703 = vpop.f32.mrb[0].mxu0
  %v704 = vadd.f32 %v633, %v703
  %v705 = vpop.f32.mrb[0].mxu0
  %706 = vdwg.mxu0
  %v707 = vmax.f32 %v704, 0.0
  %v708 = vld [vmem:[%s0 + $0x88] sm:$0xff]
  %v709 = vld [vmem:[%s0 + $0x90] sm:$0xff]
  %v710 = vld [vmem:[%s0 + $0x98] sm:$0xff]
  %v711 = vld [vmem:[%s0 + $0xa0] sm:$0xff]
  %v712 = vlaneseq
  %v713 = vshrl.u32 %v712, 7
  %v714 = vsub.s32 5, %v713
  %v715 = vrot.slane %v11, %v714
  %v717 = vsel %vm199, %v707, 0
  %719 = vmatprep.subr.mxu0 0.0
  %720 = vmatpush1.msra.mxu0 %v708
  %721 = vmatprep.subr.mxu0 0.0
  %722 = vmatpush1.msra.mxu0 %v709
  %723 = vmatprep.subr.mxu0 0.0
  %724 = vmatpush1.msra.mxu0 %v710
  %725 = vmatprep.subr.mxu0 0.0
  %726 = vmatpush1.msra.mxu0 %v711
  %727 = vmatprep.subr.mxu0 0.0
  %728 = vmatpush1.msra.mxu0 0.0
  %729 = vmatprep.subr.mxu0 0.0
  %730 = vmatpush1.msra.mxu0 0.0
  %731 = vmatprep.subr.mxu0 0.0
  %732 = vmatpush1.msra.mxu0 0.0
  %733 = vmatprep.subr.mxu0 0.0
  %734 = vmatpush1.msra.mxu0 0.0
  %735 = vmatprep.subr.mxu0 0.0
  %736 = vmatpush1.msra.mxu0 0.0
  %737 = vmatprep.subr.mxu0 0.0
  %738 = vmatpush1.msra.mxu0 0.0
  %739 = vmatprep.subr.mxu0 0.0
  %740 = vmatpush1.msra.mxu0 0.0
  %741 = vmatprep.subr.mxu0 0.0
  %742 = vmatpush1.msra.mxu0 0.0
  %743 = vmatprep.subr.mxu0 0.0
  %744 = vmatpush1.msra.mxu0 0.0
  %745 = vmatprep.subr.mxu0 0.0
  %746 = vmatpush1.msra.mxu0 0.0
  %747 = vmatprep.subr.mxu0 0.0
  %748 = vmatpush1.msra.mxu0 0.0
  %749 = vmatprep.subr.mxu0 0.0
  %750 = vmatpush1.msra.mxu0 0.0
  %751 = vmatprep.subr.mxu0 0.0
  %752 = vmatpush1.msra.mxu0 0.0
  %753 = vmatprep.subr.mxu0 0.0
  %754 = vmatpush1.msra.mxu0 0.0
  %755 = vmatprep.subr.mxu0 0.0
  %756 = vmatpush1.msra.mxu0 0.0
  %757 = vmatprep.subr.mxu0 0.0
  %758 = vmatpush1.msra.mxu0 0.0
  %759 = vmatprep.subr.mxu0 0.0
  %760 = vmatpush1.msra.mxu0 0.0
  %761 = vmatprep.subr.mxu0 0.0
  %762 = vmatpush1.msra.mxu0 0.0
  %763 = vmatprep.subr.mxu0 0.0
  %764 = vmatpush1.msra.mxu0 0.0
  %765 = vmatprep.subr.mxu0 0.0
  %766 = vmatpush1.msra.mxu0 0.0
  %767 = vmatprep.subr.mxu0 0.0
  %768 = vmatpush1.msra.mxu0 0.0
  %769 = vmatprep.subr.mxu0 0.0
  %770 = vmatpush1.msra.mxu0 0.0
  %771 = vmatprep.subr.mxu0 0.0
  %772 = vmatpush1.msra.mxu0 0.0
  %773 = vmatprep.subr.mxu0 0.0
  %774 = vmatpush1.msra.mxu0 0.0
  %775 = vmatprep.subr.mxu0 0.0
  %776 = vmatpush1.msra.mxu0 0.0
  %777 = vmatprep.subr.mxu0 0.0
  %778 = vmatpush1.msra.mxu0 0.0
  %779 = vmatprep.subr.mxu0 0.0
  %780 = vmatpush1.msra.mxu0 0.0
  %781 = vmatprep.subr.mxu0 0.0
  %782 = vmatpush1.msra.mxu0 0.0
  %783 = vmatprep.mubr.f32.mxu0 0.0
  %784 = vmatmul.mubr.f32.gmra.mrb[0].mxu0 %v717
  %v785 = vpop.f32.mrb[0].mxu0
  %v786 = vadd.f32 %v715, %v785
  %v787 = vpop.f32.mrb[0].mxu0
  %788 = vdwg.mxu0
  %v789 = vmax.f32 %v786, 0.0
  %v790 = vld [vmem:[%s0 + $0xa8] sm:$0xff]
  %v791 = vld [vmem:[%s0 + $0xb0] sm:$0xff]
  %v792 = vld [vmem:[%s0 + $0xb8] sm:$0xff]
  %v793 = vld [vmem:[%s0 + $0xc0] sm:$0xff]
  %v794 = vlaneseq
  %v795 = vshrl.u32 %v794, 7
  %v796 = vsub.s32 6, %v795
  %v797 = vrot.slane %v11, %v796
  %v799 = vsel %vm199, %v789, 0
  %801 = vmatprep.subr.mxu0 0.0
  %802 = vmatpush1.msra.mxu0 %v790
  %803 = vmatprep.subr.mxu0 0.0
  %804 = vmatpush1.msra.mxu0 %v791
  %805 = vmatprep.subr.mxu0 0.0
  %806 = vmatpush1.msra.mxu0 %v792
  %807 = vmatprep.subr.mxu0 0.0
  %808 = vmatpush1.msra.mxu0 %v793
  %809 = vmatprep.subr.mxu0 0.0
  %810 = vmatpush1.msra.mxu0 0.0
  %811 = vmatprep.subr.mxu0 0.0
  %812 = vmatpush1.msra.mxu0 0.0
  %813 = vmatprep.subr.mxu0 0.0
  %814 = vmatpush1.msra.mxu0 0.0
  %815 = vmatprep.subr.mxu0 0.0
  %816 = vmatpush1.msra.mxu0 0.0
  %817 = vmatprep.subr.mxu0 0.0
  %818 = vmatpush1.msra.mxu0 0.0
  %819 = vmatprep.subr.mxu0 0.0
  %820 = vmatpush1.msra.mxu0 0.0
  %821 = vmatprep.subr.mxu0 0.0
  %822 = vmatpush1.msra.mxu0 0.0
  %823 = vmatprep.subr.mxu0 0.0
  %824 = vmatpush1.msra.mxu0 0.0
  %825 = vmatprep.subr.mxu0 0.0
  %826 = vmatpush1.msra.mxu0 0.0
  %827 = vmatprep.subr.mxu0 0.0
  %828 = vmatpush1.msra.mxu0 0.0
  %829 = vmatprep.subr.mxu0 0.0
  %830 = vmatpush1.msra.mxu0 0.0
  %831 = vmatprep.subr.mxu0 0.0
  %832 = vmatpush1.msra.mxu0 0.0
  %833 = vmatprep.subr.mxu0 0.0
  %834 = vmatpush1.msra.mxu0 0.0
  %835 = vmatprep.subr.mxu0 0.0
  %836 = vmatpush1.msra.mxu0 0.0
  %837 = vmatprep.subr.mxu0 0.0
  %838 = vmatpush1.msra.mxu0 0.0
  %839 = vmatprep.subr.mxu0 0.0
  %840 = vmatpush1.msra.mxu0 0.0
  %841 = vmatprep.subr.mxu0 0.0
  %842 = vmatpush1.msra.mxu0 0.0
  %843 = vmatprep.subr.mxu0 0.0
  %844 = vmatpush1.msra.mxu0 0.0
  %845 = vmatprep.subr.mxu0 0.0
  %846 = vmatpush1.msra.mxu0 0.0
  %847 = vmatprep.subr.mxu0 0.0
  %848 = vmatpush1.msra.mxu0 0.0
  %849 = vmatprep.subr.mxu0 0.0
  %850 = vmatpush1.msra.mxu0 0.0
  %851 = vmatprep.subr.mxu0 0.0
  %852 = vmatpush1.msra.mxu0 0.0
  %853 = vmatprep.subr.mxu0 0.0
  %854 = vmatpush1.msra.mxu0 0.0
  %855 = vmatprep.subr.mxu0 0.0
  %856 = vmatpush1.msra.mxu0 0.0
  %857 = vmatprep.subr.mxu0 0.0
  %858 = vmatpush1.msra.mxu0 0.0
  %859 = vmatprep.subr.mxu0 0.0
  %860 = vmatpush1.msra.mxu0 0.0
  %861 = vmatprep.subr.mxu0 0.0
  %862 = vmatpush1.msra.mxu0 0.0
  %863 = vmatprep.subr.mxu0 0.0
  %864 = vmatpush1.msra.mxu0 0.0
  %865 = vmatprep.mubr.f32.mxu0 0.0
  %866 = vmatmul.mubr.f32.gmra.mrb[0].mxu0 %v799
  %v867 = vpop.f32.mrb[0].mxu0
  %v868 = vadd.f32 %v797, %v867
  %v869 = vpop.f32.mrb[0].mxu0
  %870 = vdwg.mxu0
  %v871 = vld [vmem:[%s1 + $0x48] sm:$0xff]
  %v872 = vadd.f32 %v868, %v871
  %v873 = vlaneseq
  %v874 = vand.u32 %v873, 127
  %vm875 = vcmp.ge.f32.partialorder %v872, 0.0
  %vm876 = vcmp.lt.s32.totalorder %v874, 28
  %vm877 = vmand %vm875, %vm876
  %v878 = vsel %vm877, 1.0, 0.0
  %v879 = vld [vmem:[%s1] sm:$0xff]
  %v880 = vld [vmem:[%s1 + $0x8] sm:$0xff]
  %v881 = vld [vmem:[%s1 + $0x10] sm:$0xff]
  %v882 = vld [vmem:[%s1 + $0x18] sm:$0xff]
  %v884 = vsel %vm199, %v878, 0
  %886 = vmatprep.subr.mxu0 0.0
  %887 = vmatpush1.msra.mxu0 %v879
  %888 = vmatprep.subr.mxu0 0.0
  %889 = vmatpush1.msra.mxu0 %v880
  %890 = vmatprep.subr.mxu0 0.0
  %891 = vmatpush1.msra.mxu0 %v881
  %892 = vmatprep.subr.mxu0 0.0
  %893 = vmatpush1.msra.mxu0 %v882
  %894 = vmatprep.subr.mxu0 0.0
  %895 = vmatpush1.msra.mxu0 0.0
  %896 = vmatprep.subr.mxu0 0.0
  %897 = vmatpush1.msra.mxu0 0.0
  %898 = vmatprep.subr.mxu0 0.0
  %899 = vmatpush1.msra.mxu0 0.0
  %900 = vmatprep.subr.mxu0 0.0
  %901 = vmatpush1.msra.mxu0 0.0
  %902 = vmatprep.subr.mxu0 0.0
  %903 = vmatpush1.msra.mxu0 0.0
  %904 = vmatprep.subr.mxu0 0.0
  %905 = vmatpush1.msra.mxu0 0.0
  %906 = vmatprep.subr.mxu0 0.0
  %907 = vmatpush1.msra.mxu0 0.0
  %908 = vmatprep.subr.mxu0 0.0
  %909 = vmatpush1.msra.mxu0 0.0
  %910 = vmatprep.subr.mxu0 0.0
  %911 = vmatpush1.msra.mxu0 0.0
  %912 = vmatprep.subr.mxu0 0.0
  %913 = vmatpush1.msra.mxu0 0.0
  %914 = vmatprep.subr.mxu0 0.0
  %915 = vmatpush1.msra.mxu0 0.0
  %916 = vmatprep.subr.mxu0 0.0
  %917 = vmatpush1.msra.mxu0 0.0
  %918 = vmatprep.subr.mxu0 0.0
  %919 = vmatpush1.msra.mxu0 0.0
  %920 = vmatprep.subr.mxu0 0.0
  %921 = vmatpush1.msra.mxu0 0.0
  %922 = vmatprep.subr.mxu0 0.0
  %923 = vmatpush1.msra.mxu0 0.0
  %924 = vmatprep.subr.mxu0 0.0
  %925 = vmatpush1.msra.mxu0 0.0
  %926 = vmatprep.subr.mxu0 0.0
  %927 = vmatpush1.msra.mxu0 0.0
  %928 = vmatprep.subr.mxu0 0.0
  %929 = vmatpush1.msra.mxu0 0.0
  %930 = vmatprep.subr.mxu0 0.0
  %931 = vmatpush1.msra.mxu0 0.0
  %932 = vmatprep.subr.mxu0 0.0
  %933 = vmatpush1.msra.mxu0 0.0
  %934 = vmatprep.subr.mxu0 0.0
  %935 = vmatpush1.msra.mxu0 0.0
  %936 = vmatprep.subr.mxu0 0.0
  %937 = vmatpush1.msra.mxu0 0.0
  %938 = vmatprep.subr.mxu0 0.0
  %939 = vmatpush1.msra.mxu0 0.0
  %940 = vmatprep.subr.mxu0 0.0
  %941 = vmatpush1.msra.mxu0 0.0
  %942 = vmatprep.subr.mxu0 0.0
  %943 = vmatpush1.msra.mxu0 0.0
  %944 = vmatprep.subr.mxu0 0.0
  %945 = vmatpush1.msra.mxu0 0.0
  %946 = vmatprep.subr.mxu0 0.0
  %947 = vmatpush1.msra.mxu0 0.0
  %948 = vmatprep.subr.mxu0 0.0
  %949 = vmatpush1.msra.mxu0 0.0
  %950 = vmatprep.mubr.f32.mxu0 0.0
  %951 = vmatmul.mubr.f32.gmra.mrb[0].mxu0 %v884
  %v952 = vpop.f32.mrb[0].mxu0
  %v953 = vadd.f32 0.0, %v952
  %v954 = vpop.f32.mrb[0].mxu0
  %955 = vdwg.mxu0
  %956 = vst [vmem:[%s2] sm:$0xff] %v953
  // Predicated region
  $region10: #{vae_forward.1} parent=0 // pred_check
    _
  $region11: #{vae_forward.1} parent=0 // pred_check_branch
    %958 = sbr.rel (0) target = $region13
  $region12: #{vae_forward.1} parent=0 // pred_region
    _
  $region13: #{vae_forward.1} parent=0 // pred_fallthru
    _
  // Predicated region
  $region14: #{vae_forward.1} parent=0 // pred_check
    _
  $region15: #{vae_forward.1} parent=0 // pred_check_branch
    %960 = sbr.rel (0) target = $region17
  $region16: #{vae_forward.1} parent=0 // pred_region
    _
  $region17: #{vae_forward.1} parent=0 // pred_fallthru
    _

</llo_original>
